<compile_context>
chip_gen: v7x
topology: tpu7x:2x2x1
jax: 0.10.0
libtpu: 0.0.40
codegen_flags: <defaults>
</compile_context>

<pallas_src>
import functools
import math

import jax
import jax.numpy as jnp
from jax.experimental import pallas as pl
from jax.experimental.pallas import tpu as pltpu

# MXU operand dtype.  Accumulation is f32 (preferred_element_type) and all
# softmax / LayerNorm math is f32.
COMPUTE_DTYPE = jnp.bfloat16
_LN_EPS = 1e-5
_VMEM_LIMIT = 48 * 1024 * 1024   # raise past 32 MiB default, headroom on v7x


# ------------------------------ helpers ------------------------------------ #

def _row_tile(n, target=256):
    """Row tile for row-parallel kernels (rows get zero-padded to a multiple)."""
    if n >= target:
        return target
    return ((n + 7) // 8) * 8


def _seq_tile(s, target=256):
    """Query tile for attention: must divide S exactly (no padded keys)."""
    if s <= target:
        return s
    for t in range(target, 7, -8):
        if s % t == 0:
            return t
    return s


def _pad_rows(x, tm):
    n = x.shape[0]
    n_pad = ((n + tm - 1) // tm) * tm
    if n_pad != n:
        x = jnp.pad(x, ((0, n_pad - n), (0, 0)))
    return x, n


def _pad_cols(w, mult=128):
    d = w.shape[1]
    d_pad = ((d + mult - 1) // mult) * mult
    if d_pad != d:
        w = jnp.pad(w, ((0, 0), (0, d_pad - d)))
    return w, d


def _layer_norm(z, g, b):
    mu = jnp.mean(z, axis=-1, keepdims=True)
    var = jnp.mean((z - mu) ** 2, axis=-1, keepdims=True)
    return (z - mu) * jax.lax.rsqrt(var + _LN_EPS) * g + b


def _cparams(n_axes):
    return pltpu.CompilerParams(
        dimension_semantics=("parallel",) * n_axes,
        vmem_limit_bytes=_VMEM_LIMIT)


# ----------------------------- Pallas kernels ------------------------------ #

def _linear_kernel(x_ref, w_ref, b_ref, o_ref):
    # y = x @ W + b   (W stored (d_in, d_out), bf16); row-tiled over x.
    o_ref[...] = (jnp.dot(x_ref[...].astype(COMPUTE_DTYPE),
                          w_ref[...].astype(COMPUTE_DTYPE),
                          preferred_element_type=jnp.float32)
                  + b_ref[...])


def linear(x, w, b):
    d_in = x.shape[1]
    d_out = w.shape[1]
    tm = _row_tile(x.shape[0])
    xp, n = _pad_rows(x, tm)
    n_pad = xp.shape[0]
    out = pl.pallas_call(
        _linear_kernel,
        out_shape=jax.ShapeDtypeStruct((n_pad, d_out), jnp.float32),
        grid=(n_pad // tm,),
        in_specs=[
            pl.BlockSpec((tm, d_in), lambda i: (i, 0)),
            pl.BlockSpec(w.shape, lambda i: (0, 0)),
            pl.BlockSpec(b.shape, lambda i: (0, 0)),
        ],
        out_specs=pl.BlockSpec((tm, d_out), lambda i: (i, 0)),
        compiler_params=_cparams(1),
    )(xp, w, b)
    return out[:n]


def _layer_kernel(xf_ref, xq_ref,
                  wq_ref, bq_ref, wk_ref, bk_ref, wv_ref, bv_ref,
                  wo_ref, bo_ref, g0_ref, b0_ref,
                  w1_ref, fb1_ref, w2_ref, fb2_ref, g1_ref, bl1_ref,
                  o_ref, a_scr, *, nhead, scale, tq):
    # One (batch, query-tile) pair per program.  Fuses the entire
    # TransformerLayer: QKV projection, per-head softmax attention (additive
    # float tril mask), output projection, residual + LN0, FFN (linear1 +
    # ReLU + linear2), residual + LN1.
    x_full = xf_ref[0]                       # (S, D)  f32 — K/V source
    x_t = xq_ref[0]                          # (tq, D) f32 — queries / residual
    S, D = x_full.shape
    dh = D // nhead

    xf_bf = x_full.astype(COMPUTE_DTYPE)
    xt_bf = x_t.astype(COMPUTE_DTYPE)

    # Q only for this tile's rows; K/V over the full sequence.
    # TODO(synk): for S//tq > 1, K/V projection is recomputed per query tile;
    # hoist it (or go flash) for long sequences.
    q_full = jnp.dot(xt_bf, wq_ref[...].astype(COMPUTE_DTYPE),
                     preferred_element_type=jnp.float32) + bq_ref[...]   # (tq, D)
    k_full = jnp.dot(xf_bf, wk_ref[...].astype(COMPUTE_DTYPE),
                     preferred_element_type=jnp.float32) + bk_ref[...]   # (S, D)
    v_full = jnp.dot(xf_bf, wv_ref[...].astype(COMPUTE_DTYPE),
                     preferred_element_type=jnp.float32) + bv_ref[...]   # (S, D)

    # Additive float lower-triangular mask (PyTorch float attn_mask semantics:
    # values are ADDED to the scores).  Only the (tq, S) slice for this tile.
    qi = pl.program_id(1)
    row = qi * tq + jax.lax.broadcasted_iota(jnp.int32, (tq, S), 0)
    col = jax.lax.broadcasted_iota(jnp.int32, (tq, S), 1)
    add_mask = (row >= col).astype(jnp.float32)

    # Per-head attention; each head's result lands at its column offset in a
    # (tq, D) VMEM scratch so the output projection is ONE full-depth matmul.
    # TODO(synk): per-head slices are dh-wide (not 128-lane aligned); pad dh
    # to 128 per head at real d_model for unmasked vector loads.
    for h in range(nhead):                    # static unroll
        sl = slice(h * dh, (h + 1) * dh)
        q = (q_full[:, sl] * scale).astype(COMPUTE_DTYPE)     # (tq, dh)
        k = k_full[:, sl].astype(COMPUTE_DTYPE)               # (S, dh)
        v = v_full[:, sl].astype(COMPUTE_DTYPE)               # (S, dh)
        s = jax.lax.dot_general(q, k, (((1,), (1,)), ((), ())),
                                preferred_element_type=jnp.float32)  # (tq, S)
        s = s + add_mask
        s = s - jnp.max(s, axis=-1, keepdims=True)
        p = jnp.exp(s)
        p = p * pl.reciprocal(jnp.sum(p, axis=-1, keepdims=True), approx=True)
        a_scr[:, sl] = jnp.dot(p.astype(COMPUTE_DTYPE), v,
                               preferred_element_type=jnp.float32)    # (tq, dh)

    attn = (jnp.dot(a_scr[...].astype(COMPUTE_DTYPE),
                    wo_ref[...].astype(COMPUTE_DTYPE),
                    preferred_element_type=jnp.float32)
            + bo_ref[...])                                            # (tq, D)

    t = _layer_norm(x_t + attn, g0_ref[...], b0_ref[...])             # LN0

    # FFN: linear1 + ReLU + linear2, residual, LN1.
    # TODO(synk): add a dff-chunk reduction axis with a VMEM accumulator for
    # very large dim_feedforward on v7x (64 MiB VMEM).
    h1 = jnp.maximum(
        jnp.dot(t.astype(COMPUTE_DTYPE), w1_ref[...].astype(COMPUTE_DTYPE),
                preferred_element_type=jnp.float32) + fb1_ref[...], 0.0)
    y = (jnp.dot(h1.astype(COMPUTE_DTYPE), w2_ref[...].astype(COMPUTE_DTYPE),
                 preferred_element_type=jnp.float32) + fb2_ref[...])

    o_ref[0] = _layer_norm(t + y, g1_ref[...], bl1_ref[...]).astype(o_ref.dtype)


def transformer_layer(x, lp, nhead):
    B, S, D = x.shape
    dh = D // nhead
    scale = 1.0 / math.sqrt(dh)
    tq = _seq_tile(S)

    def wspec(shape):
        return pl.BlockSpec(shape, lambda b, q: (0, 0))

    return pl.pallas_call(
        functools.partial(_layer_kernel, nhead=nhead, scale=scale, tq=tq),
        out_shape=jax.ShapeDtypeStruct((B, S, D), jnp.float32),
        grid=(B, S // tq),
        in_specs=[
            pl.BlockSpec((1, S, D), lambda b, q: (b, 0, 0)),    # full seq (K/V)
            pl.BlockSpec((1, tq, D), lambda b, q: (b, q, 0)),   # query tile
            wspec(lp["wq"].shape), wspec(lp["bq"].shape),
            wspec(lp["wk"].shape), wspec(lp["bk"].shape),
            wspec(lp["wv"].shape), wspec(lp["bv"].shape),
            wspec(lp["wo"].shape), wspec(lp["bo"].shape),
            wspec(lp["ln0_g"].shape), wspec(lp["ln0_b"].shape),
            wspec(lp["ff_w1"].shape), wspec(lp["ff_b1"].shape),
            wspec(lp["ff_w2"].shape), wspec(lp["ff_b2"].shape),
            wspec(lp["ln1_g"].shape), wspec(lp["ln1_b"].shape),
        ],
        out_specs=pl.BlockSpec((1, tq, D), lambda b, q: (b, q, 0)),
        scratch_shapes=[pltpu.VMEM((tq, D), jnp.float32)],
        compiler_params=_cparams(2),
    )(x, x, lp["wq"], lp["bq"], lp["wk"], lp["bk"], lp["wv"], lp["bv"],
      lp["wo"], lp["bo"], lp["ln0_g"], lp["ln0_b"],
      lp["ff_w1"], lp["ff_b1"], lp["ff_w2"], lp["ff_b2"],
      lp["ln1_g"], lp["ln1_b"])


def _ln_head_kernel(x_ref, g_ref, b_ref, w_ref, o_ref):
    # Fuses: final LayerNorm + bias-free head matmul.  Row-tiled, lane-dense
    # output (head weight columns padded to a multiple of 128 by the wrapper).
    zn = _layer_norm(x_ref[...], g_ref[...], b_ref[...])
    o_ref[...] = jnp.dot(zn.astype(COMPUTE_DTYPE),
                         w_ref[...].astype(COMPUTE_DTYPE),
                         preferred_element_type=jnp.float32)


def ln_head(x, g, b, w):
    D = x.shape[1]
    wp, d_out = _pad_cols(w, 128)       # lane-dense stores
    d_pad = wp.shape[1]
    tm = _row_tile(x.shape[0])
    xp, n = _pad_rows(x, tm)
    n_pad = xp.shape[0]
    out = pl.pallas_call(
        _ln_head_kernel,
        out_shape=jax.ShapeDtypeStruct((n_pad, d_pad), jnp.float32),
        grid=(n_pad // tm,),
        in_specs=[
            pl.BlockSpec((tm, D), lambda i: (i, 0)),
            pl.BlockSpec(g.shape, lambda i: (0, 0)),
            pl.BlockSpec(b.shape, lambda i: (0, 0)),
            pl.BlockSpec((D, d_pad), lambda i: (0, 0)),
        ],
        out_specs=pl.BlockSpec((tm, d_pad), lambda i: (i, 0)),
        compiler_params=_cparams(1),
    )(xp, g, b, wp)
    return out[:n, :d_out]


# ----------------------------- parameters ---------------------------------- #

def init_params(key, d_event, d_model, nhead, num_layers, dff, d_out):
    keys = iter(jax.random.split(key, 5 + 16 * num_layers))

    def w(shape, scale=0.05):      # matmul weights stored bf16 (MXU operands)
        return (scale * jax.random.normal(next(keys), shape)).astype(jnp.bfloat16)

    def f(shape, scale=0.05):      # biases / LN params stay f32
        return (scale * jax.random.normal(next(keys), shape)).astype(jnp.float32)

    params = {
        "emb_w": w((d_event, d_model)),
        "emb_b": f((1, d_model)),
        "lnf_g": 1.0 + f((1, d_model)),
        "lnf_b": f((1, d_model)),
        "head_w": w((d_model, d_out)),   # head has no bias in the module
        "layers": [],
    }
    for _ in range(num_layers):
        params["layers"].append({
            "wq": w((d_model, d_model)), "bq": f((1, d_model)),
            "wk": w((d_model, d_model)), "bk": f((1, d_model)),
            "wv": w((d_model, d_model)), "bv": f((1, d_model)),
            "wo": w((d_model, d_model)), "bo": f((1, d_model)),
            "ln0_g": 1.0 + f((1, d_model)), "ln0_b": f((1, d_model)),
            "ff_w1": w((d_model, dff)), "ff_b1": f((1, dff)),
            "ff_w2": w((dff, d_model)), "ff_b2": f((1, d_model)),
            "ln1_g": 1.0 + f((1, d_model)), "ln1_b": f((1, d_model)),
        })
    return params


# ----------------------------- forward pass --------------------------------- #

def decoder_forward(x, params, nhead):
    B, S, d_event = x.shape
    d_model = params["emb_w"].shape[1]
    n = B * S

    # embedding (row-tiled linear)
    h = linear(x.reshape(n, d_event), params["emb_w"], params["emb_b"])
    h = h.reshape(B, S, d_model)

    # N fused TransformerLayer blocks (one pallas_call per layer)
    for lp in params["layers"]:
        h = transformer_layer(h, lp, nhead)

    # fused final LayerNorm + bias-free head (lane-dense padded output)
    out = ln_head(h.reshape(n, d_model),
                  params["lnf_g"], params["lnf_b"], params["head_w"])
    return out.reshape(B, S, -1)


# ----------------------------- pure-JAX reference --------------------------- #

def reference_forward(x, params, nhead):
    f32 = jnp.float32
    B, S, d_event = x.shape
    d_model = params["emb_w"].shape[1]
    dh = d_model // nhead
    scale = 1.0 / math.sqrt(dh)

    def ln(z, g, b):
        mu = z.mean(-1, keepdims=True)
        var = ((z - mu) ** 2).mean(-1, keepdims=True)
        return (z - mu) / jnp.sqrt(var + _LN_EPS) * g + b

    h = x.reshape(B * S, d_event) @ params["emb_w"].astype(f32) + params["emb_b"]
    mask = jnp.tril(jnp.ones((S, S), f32))
    for lp in params["layers"]:
        q = (h @ lp["wq"].astype(f32) + lp["bq"]).reshape(B, S, nhead, dh).transpose(0, 2, 1, 3)
        k = (h @ lp["wk"].astype(f32) + lp["bk"]).reshape(B, S, nhead, dh).transpose(0, 2, 1, 3)
        v = (h @ lp["wv"].astype(f32) + lp["bv"]).reshape(B, S, nhead, dh).transpose(0, 2, 1, 3)
        s = jnp.einsum("bhqd,bhkd->bhqk", q * scale, k) + mask
        p = jax.nn.softmax(s, axis=-1)
        a = jnp.einsum("bhqk,bhkd->bhqd", p, v)
        a = a.transpose(0, 2, 1, 3).reshape(B * S, d_model)
        a = a @ lp["wo"].astype(f32) + lp["bo"]
        h = ln(h + a, lp["ln0_g"], lp["ln0_b"])
        ff = (jnp.maximum(h @ lp["ff_w1"].astype(f32) + lp["ff_b1"], 0.0)
              @ lp["ff_w2"].astype(f32) + lp["ff_b2"])
        h = ln(h + ff, lp["ln1_g"], lp["ln1_b"])
    h = ln(h, params["lnf_g"], params["lnf_b"])
    return (h @ params["head_w"].astype(f32)).reshape(B, S, -1)


# --------------------------------- main ------------------------------------- #

if __name__ == "__main__":
    key = jax.random.PRNGKey(0)
    kx, kp = jax.random.split(key)

    B, S = 2, 8
    d_event, d_model, nhead = 16, 32, 4
    num_layers, dim_feedforward, d_out = 2, 64, 8

    x = jax.random.normal(kx, (B, S, d_event), jnp.float32)
    params = init_params(kp, d_event, d_model, nhead, num_layers,
                         dim_feedforward, d_out)

    out = decoder_forward(x, params, nhead)
    out = jax.block_until_ready(out)

    ref = reference_forward(x, params, nhead)
    assert out.shape == (B, S, d_out), out.shape
    # bf16 matmul operands + approx reciprocal -> looser tolerance vs f32 ref.
    assert jnp.allclose(out, ref, atol=3e-2, rtol=3e-2), \
        float(jnp.max(jnp.abs(out - ref)))

    print("KERNEL_OK")
</pallas_src>

<mosaic_0001>
module attributes {stable_mosaic.version = 11 : i64} {
  func.func @_linear_kernel(%arg0: i32, %arg1: memref<16x16xf32, #tpu.memory_space<vmem>>, %arg2: memref<16x32xbf16, #tpu.memory_space<vmem>>, %arg3: memref<1x32xf32, #tpu.memory_space<vmem>>, %arg4: memref<16x32xf32, #tpu.memory_space<vmem>>) attributes {dimension_semantics = [#tpu.dimension_semantics<parallel>], iteration_bounds = array<i64: 1>, scalar_prefetch = 0 : i64, scratch_operands = 0 : i64, tpu.core_type = #tpu.core_type<tc>, window_params = [{transform_indices = @transform_0, window_bounds = array<i64: 16, 16>}, {pipeline_mode = #tpu.pipeline_mode<synchronous>, transform_indices = @transform_1, window_bounds = array<i64: 16, 32>}, {pipeline_mode = #tpu.pipeline_mode<synchronous>, transform_indices = @transform_2, window_bounds = array<i64: 1, 32>}, {transform_indices = @transform_3, window_bounds = array<i64: 16, 32>}]} {
    %c0 = arith.constant 0 : index
    %c0_0 = arith.constant 0 : index
    %0 = vector.load %arg1[%c0, %c0_0] : memref<16x16xf32, #tpu.memory_space<vmem>>, vector<16x16xf32>
    %1 = arith.truncf %0 : vector<16x16xf32> to vector<16x16xbf16>
    %c0_1 = arith.constant 0 : index
    %c0_2 = arith.constant 0 : index
    %2 = vector.load %arg2[%c0_1, %c0_2] : memref<16x32xbf16, #tpu.memory_space<vmem>>, vector<16x32xbf16>
    %cst = arith.constant dense<0.000000e+00> : vector<16x32xf32>
    %3 = tpu.matmul %1, %2, %cst {dimension_numbers = #tpu.dot_dimension_numbers<[1], [0], [0], [1], [0, 0, 1, 1], [], []>} : vector<16x16xbf16>, vector<16x32xbf16>, vector<16x32xf32> -> vector<16x32xf32>
    %c0_3 = arith.constant 0 : index
    %c0_4 = arith.constant 0 : index
    %4 = vector.load %arg3[%c0_3, %c0_4] : memref<1x32xf32, #tpu.memory_space<vmem>>, vector<1x32xf32>
    %5 = vector.broadcast %4 : vector<1x32xf32> to vector<16x32xf32>
    %6 = arith.addf %3, %5 : vector<16x32xf32>
    %c0_5 = arith.constant 0 : index
    %c0_6 = arith.constant 0 : index
    %7 = vector.load %arg4[%c0_5, %c0_6] : memref<16x32xf32, #tpu.memory_space<vmem>>, vector<16x32xf32>
    tpu.vector_store %arg4[%c0_5, %c0_6], %6 {strides = array<i32>} : memref<16x32xf32, #tpu.memory_space<vmem>>, vector<16x32xf32>,
    return
  }
  func.func @transform_0(%arg0: i32) -> (i32, i32) {
    %c0_i32 = arith.constant 0 : i32
    %c0_i32_0 = arith.constant 0 : i32
    return %arg0, %c0_i32 : i32, i32
  }
  func.func @transform_1(%arg0: i32) -> (i32, i32) {
    %c0_i32 = arith.constant 0 : i32
    %c0_i32_0 = arith.constant 0 : i32
    %c0_i32_1 = arith.constant 0 : i32
    return %c0_i32, %c0_i32_0 : i32, i32
  }
  func.func @transform_2(%arg0: i32) -> (i32, i32) {
    %c0_i32 = arith.constant 0 : i32
    %c0_i32_0 = arith.constant 0 : i32
    %c0_i32_1 = arith.constant 0 : i32
    return %c0_i32, %c0_i32_0 : i32, i32
  }
  func.func @transform_3(%arg0: i32) -> (i32, i32) {
    %c0_i32 = arith.constant 0 : i32
    %c0_i32_0 = arith.constant 0 : i32
    return %arg0, %c0_i32 : i32, i32
  }
}

</mosaic_0001>

<llo_original>
// kernel: tpu_custom_call.1
$region0: #{tpu_custom_call.1}
  #allocation0 [shape = 'u32[]', space=smem, size = 0x4, offset = 0x4, fixed_abs, tag = 'smem constant byte address 0x4 - core index']
  #allocation1 [shape = 'u32[144,128]{1,0:T(1,128)}', space=vmem, size = 0x12000, scoped, tag = 'internal scratch']
  %s0 = inlined_call_operand.hbm [shape: f32[16,16], index: 0, kind: input, shape index: {}]
  %s1 = inlined_call_operand.hbm [shape: bf16[16,32], index: 1, kind: input, shape index: {}]
  %s2 = inlined_call_operand.vmem [shape: f32[1,32], index: 2, kind: input, shape index: {}]
  %s3 = inlined_call_operand.hbm [shape: f32[16,32], index: 3, kind: output, shape index: {}]
  %s4 = sld [smem:[#allocation0]]
  $region30: #{tpu_custom_call.1} parent=0
    _
  %s6 = ssub.s32 1, %s4
  %s7 = scalar_select 0, %s6, %s4
  $region1: #{tpu_custom_call.1} parent=0
    #allocation2 [shape = 'u8[8192]{0}', space=vmem, size = 0x2000, scoped, tag = 'input window, operand 0, single buffered']
    #allocation3 [shape = 's32[1]{0}', space=sflag, size = 0x4, scoped, tag = 'scoped memory for tpu_custom_call.1']
    #allocation4 [shape = 's32[1]{0}', space=sflag, size = 0x4, scoped, tag = 'scoped memory for tpu_custom_call.1']
    #allocation5 [shape = 'u8[4096]{0}', space=vmem, size = 0x1000, scoped, tag = 'input window, operand 1, single buffered']
    #allocation6 [shape = 's32[1]{0}', space=sflag, size = 0x4, scoped, tag = 'scoped memory for tpu_custom_call.1']
    #allocation7 [shape = 'u8[8192]{0}', space=vmem, size = 0x2000, scoped, tag = 'output window, operand 0, single buffered']
    %8 = vsyncpa [#allocation3], 0
    %9 = vsyncpa [#allocation6], 0
    %10 = vsyncpa [#allocation4], 0
    // Predicated region
    $region2: #{tpu_custom_call.1} parent=1 // pred_check
      _
    $region3: #{tpu_custom_call.1} parent=1 // pred_check_branch
      %12 = sbr.rel (0) target = $region5
    $region4: #{tpu_custom_call.1} parent=1 // pred_region
      %s14 = ssub.s32 256, 256
      %15 = vsyncadd [#allocation3], %s14
      %s16 = sshll.u32 [#allocation2], 4
      %s17 = int_to_ptr.vmem [resolvable:$true] %s16
      %22 = dma.hbm_to_vmem [thread:$0]  %s0, 256, %s17, [#allocation3], 128, 128, 8
    $region5: #{tpu_custom_call.1} parent=1 // pred_fallthru
      _
    // Predicated region
    $region6: #{tpu_custom_call.1} parent=1 // pred_check
      _
    $region7: #{tpu_custom_call.1} parent=1 // pred_check_branch
      %24 = sbr.rel (0) target = $region9
    $region8: #{tpu_custom_call.1} parent=1 // pred_region
      %s26 = ssub.s32 128, 128
      %27 = vsyncadd [#allocation6], %s26
      %s28 = sshll.u32 [#allocation5], 4
      %s29 = int_to_ptr.vmem [resolvable:$true] %s28
      %34 = dma.hbm_to_vmem [thread:$0]  %s1, 128, %s29, [#allocation6], 64, 64, 4
    $region9: #{tpu_custom_call.1} parent=1 // pred_fallthru
      _
    // Predicated region
    $region10: #{tpu_custom_call.1} parent=1 // pred_check
      _
    $region11: #{tpu_custom_call.1} parent=1 // pred_check_branch
      %36 = sbr.rel (0) target = $region13
    $region12: #{tpu_custom_call.1} parent=1 // pred_region
      _
    $region13: #{tpu_custom_call.1} parent=1 // pred_fallthru
      _
    // Predicated region
    $region14: #{tpu_custom_call.1} parent=1 // pred_check
      _
    $region15: #{tpu_custom_call.1} parent=1 // pred_check_branch
      %38 = sbr.rel (0) target = $region17
    $region16: #{tpu_custom_call.1} parent=1 // pred_region
      %39 = dma.done [#allocation3], 256
    $region17: #{tpu_custom_call.1} parent=1 // pred_fallthru
      _
    // Predicated region
    $region18: #{tpu_custom_call.1} parent=1 // pred_check
      _
    $region19: #{tpu_custom_call.1} parent=1 // pred_check_branch
      %41 = sbr.rel (0) target = $region21
    $region20: #{tpu_custom_call.1} parent=1 // pred_region
      %42 = dma.done [#allocation6], 128
    $region21: #{tpu_custom_call.1} parent=1 // pred_fallthru
      _
    %v44 = vld [vmem:[#allocation2] sm:$0xff]
    %v45 = vld [vmem:[#allocation2 + $0x8] sm:$0xff]
    %v46 = vpack.c.bf16 %v45, %v44
    %v47 = vld [vmem:[#allocation5] sm:$0xf]
    %v48 = vld [vmem:[#allocation5 + $0x4] sm:$0xf]
    %v49 = vld [vmem:[%s2] sm:$0x1]
    %v51 = vlaneseq
    %v52 = vshrl.u32 %v51, 7
    %v53 = vsub.s32 0, %v52
    %v54 = vrot.slane %v49, %v53
    %v58 = vunpack.c.l.b16 %v47
    %v59 = vunpack.c.l.b16 %v48
    %v60 = vpack.c.b16 %v59, %v58
    %vm62 = vcmask 130048
    %v64 = vsel %vm62, %v46, 0
    %66 = vmatprep.subr.bf16.mxu0 0
    %67 = vmatpush1.bf16.msra.mxu0 %v60
    %68 = vmatprep.subr.bf16.mxu0 0
    %69 = vmatpush1.bf16.msra.mxu0 0
    %70 = vmatprep.subr.bf16.mxu0 0
    %71 = vmatpush1.bf16.msra.mxu0 0
    %72 = vmatprep.subr.bf16.mxu0 0
    %73 = vmatpush1.bf16.msra.mxu0 0
    %74 = vmatprep.subr.bf16.mxu0 0
    %75 = vmatpush1.bf16.msra.mxu0 0
    %76 = vmatprep.subr.bf16.mxu0 0
    %77 = vmatpush1.bf16.msra.mxu0 0
    %78 = vmatprep.subr.bf16.mxu0 0
    %79 = vmatpush1.bf16.msra.mxu0 0
    %80 = vmatprep.subr.bf16.mxu0 0
    %81 = vmatpush1.bf16.msra.mxu0 0
    %82 = vmatprep.subr.bf16.mxu0 0
    %83 = vmatpush1.bf16.msra.mxu0 0
    %84 = vmatprep.subr.bf16.mxu0 0
    %85 = vmatpush1.bf16.msra.mxu0 0
    %86 = vmatprep.subr.bf16.mxu0 0
    %87 = vmatpush1.bf16.msra.mxu0 0
    %88 = vmatprep.subr.bf16.mxu0 0
    %89 = vmatpush1.bf16.msra.mxu0 0
    %90 = vmatprep.subr.bf16.mxu0 0
    %91 = vmatpush1.bf16.msra.mxu0 0
    %92 = vmatprep.subr.bf16.mxu0 0
    %93 = vmatpush1.bf16.msra.mxu0 0
    %94 = vmatprep.subr.bf16.mxu0 0
    %95 = vmatpush1.bf16.msra.mxu0 0
    %96 = vmatprep.subr.bf16.mxu0 0
    %97 = vmatpush1.bf16.msra.mxu0 0
    %98 = vmatprep.mubr.bf16.mxu0 0
    %99 = vmatmul.mubr.bf16.gmra.mrb[0].mxu0 %v64
    %v100 = vpop.f32.mrb[0].mxu0
    %v101 = vadd.f32 %v54, %v100
    %v102 = vpop.f32.mrb[0].mxu0
    %v103 = vpop.f32.mrb[0].mxu0
    %v104 = vadd.f32 %v54, %v103
    %v105 = vpop.f32.mrb[0].mxu0
    %106 = vdwg.mxu0
    %vm107 = vcmask 261120
    %108 = vst.msk [vmem:[#allocation7] sm:$0xff] %vm107, %v101
    %109 = vst.msk [vmem:[#allocation7 + $0x8] sm:$0xff] %vm107, %v104
    // Predicated region
    $region22: #{tpu_custom_call.1} parent=1 // pred_check
      _
    $region23: #{tpu_custom_call.1} parent=1 // pred_check_branch
      %111 = sbr.rel (0) target = $region25
    $region24: #{tpu_custom_call.1} parent=1 // pred_region
      %s113 = ssub.s32 256, 256
      %114 = vsyncadd [#allocation4], %s113
      %s115 = sshll.u32 [#allocation7], 4
      %s116 = int_to_ptr.vmem [resolvable:$true] %s115
      %121 = dma.vmem_to_hbm [thread:$0]  %s116, 256, %s3, [#allocation4], 128, 128, 8
    $region25: #{tpu_custom_call.1} parent=1 // pred_fallthru
      _
    // Predicated region
    $region26: #{tpu_custom_call.1} parent=1 // pred_check
      _
    $region27: #{tpu_custom_call.1} parent=1 // pred_check_branch
      %123 = sbr.rel (0) target = $region29
    $region28: #{tpu_custom_call.1} parent=1 // pred_region
      %124 = dma.done [#allocation4], 256
    $region29: #{tpu_custom_call.1} parent=1 // pred_fallthru
      _
    %125 = vsyncpa [#allocation3], 1
    %126 = vsyncpa [#allocation6], 1
    %127 = vsyncpa [#allocation4], 1

</llo_original>
